<compile_context>
chip_gen: v6e
topology: v6e:2x2x1
jax: 0.10.0
libtpu: 0.0.40
codegen_flags: <defaults>
</compile_context>

<pallas_src>
from functools import partial

import jax
import jax.numpy as jnp
from jax.experimental import pallas as pl
from jax.experimental.pallas import tpu as pltpu

EPS = 1e-5      # nn.BatchNorm1d default eps
LANE = 128
SUBLANE = 8


def _round_up(x, m):
    return (x + m - 1) // m * m


# ---------------------------------------------------------------------------
# Fused kernel: grid = (phase, batch_tile)
#   phase 0: conv (im2col matmul) + resident BN sum / sum-of-squares
#   phase 1: BN (batch stats) + ReLU + AvgPool1d (lane-dense matmul)
# ---------------------------------------------------------------------------
def _fused_kernel(x_ref, w_ref, b_ref, g_ref, beta_ref, mask_ref, pool_ref,
                  o_ref,
                  conv_slab, sum_ref, sq_ref, scale_ref, shift_ref,
                  *, kernel, b_tile, l_out_pad, count, matmul_dtype):
    p = pl.program_id(0)          # 0 = conv + stats, 1 = BN + ReLU + pool
    n = pl.program_id(1)          # batch-tile index
    f32 = jnp.float32

    start = pl.multiple_of(n * b_tile, b_tile)

    # ---------------- phase 0: conv + resident BN statistics -----------------
    @pl.when(p == 0)
    def _():
        @pl.when(n == 0)
        def _():
            sum_ref[...] = jnp.zeros_like(sum_ref)
            sq_ref[...] = jnp.zeros_like(sq_ref)

        x = x_ref[...]                                  # (b_tile, C_in_p, L_pad)
        bt, c_in_p, l_pad = x.shape
        x2 = x.reshape(bt * c_in_p, l_pad)              # layout-compatible merge

        # K lane rotations (XLU slot) of the whole loaded batch tile.
        rolled = [x2 if k == 0 else pltpu.roll(x2, shift=l_pad - k, axis=1)
                  for k in range(kernel)]
        w = w_ref[...].astype(matmul_dtype)

        for b in range(b_tile):                         # static unroll (small b_tile)
            a_b = jnp.concatenate(
                [r[b * c_in_p:(b + 1) * c_in_p, :l_out_pad] for r in rolled],
                axis=0)                                 # (K*C_in_p, L_out_pad)
            conv_b = jnp.dot(w, a_b.astype(matmul_dtype),
                             preferred_element_type=f32) + b_ref[...]
            conv_slab[pl.ds(start + b, 1)] = conv_b[None]
            # mask = (valid conv column) AND (valid, non-padded batch row)
            cz = conv_b * mask_ref[b]                   # (C_out_p, L_out_pad)
            sum_ref[...] += jnp.sum(cz, axis=1, keepdims=True)
            sq_ref[...] += jnp.sum(cz * cz, axis=1, keepdims=True)

    # ---------------- phase 1: BN + ReLU + AvgPool ----------------------------
    @pl.when(p == 1)
    def _():
        @pl.when(n == 0)
        def _():
            inv_cnt = 1.0 / count
            mean = sum_ref[...] * inv_cnt
            var = jnp.maximum(sq_ref[...] * inv_cnt - mean * mean, 0.0)
            scale_ref[...] = g_ref[...] * jax.lax.rsqrt(var + EPS)
            shift_ref[...] = beta_ref[...] - mean * scale_ref[...]

        conv = conv_slab[pl.ds(start, b_tile)]          # (b_tile, C_out_p, L_out_pad)
        y = jnp.maximum(conv * scale_ref[...][None] + shift_ref[...][None], 0.0)
        bt, c_out_p, _ = conv.shape
        y2 = y.reshape(bt * c_out_p, l_out_pad)
        pooled = jnp.dot(y2.astype(matmul_dtype),
                         pool_ref[...].astype(matmul_dtype),
                         preferred_element_type=f32)    # (bt*C_out_p, L_pool_pad)
        l_pool_pad = pooled.shape[-1]
        o_ref[...] = pooled.reshape(bt, c_out_p, l_pool_pad).astype(o_ref.dtype)


def convblock1d(x, weight, bias, gamma, beta, *, kernel, pool,
                matmul_dtype=jnp.float32):
    N, C_in, L = x.shape
    C_out = weight.shape[0]
    L_out = L - kernel + 1
    L_pool = L_out // pool
    assert L_out >= 1 and L_pool >= 1

    C_in_p = _round_up(C_in, SUBLANE)
    C_out_p = _round_up(C_out, SUBLANE)
    L_pad = _round_up(L, LANE)
    L_out_pad = _round_up(L_out, LANE)
    L_pool_pad = _round_up(L_pool, LANE)          # lane-dense output store

    # Batch tile: amortize per-grid-step overhead; keep double-buffered streaming
    # blocks small relative to VMEM (v7x has only 64 MiB total).
    per_b_bytes = 4 * (C_in_p * L_pad + L_out_pad + C_out_p * L_pool_pad)
    B_TILE = int(max(1, min(N, min(32, (8 * 1024 * 1024) // max(1, 2 * per_b_bytes)))))
    NB = (N + B_TILE - 1) // B_TILE
    N_pad = NB * B_TILE

    # Conv intermediate stays resident in VMEM scratch across the phase axis.
    slab_bytes = 4 * N_pad * C_out_p * L_out_pad
    assert slab_bytes <= 24 * 1024 * 1024, (
        "conv slab too big for the fused kernel; use a streamed two-pass variant")

    f32 = jnp.float32
    x_p = jnp.pad(x.astype(f32),
                  ((0, N_pad - N), (0, C_in_p - C_in), (0, L_pad - L)))
    w_p = jnp.pad(weight.astype(f32),
                  ((0, C_out_p - C_out), (0, C_in_p - C_in), (0, 0)))
    # (C_out_p, C_in_p, K) -> (C_out_p, K*C_in_p), rows ordered k-major then c
    # to match the in-kernel im2col concat order.
    w_flat = jnp.transpose(w_p, (0, 2, 1)).reshape(C_out_p, kernel * C_in_p)
    b_col = jnp.pad(bias.astype(f32), (0, C_out_p - C_out)).reshape(C_out_p, 1)
    g_col = jnp.pad(gamma.astype(f32), (0, C_out_p - C_out)).reshape(C_out_p, 1)
    bt_col = jnp.pad(beta.astype(f32), (0, C_out_p - C_out)).reshape(C_out_p, 1)

    # Precomputed validity mask (valid batch row AND valid conv column): avoids
    # per-step iota/compare work in the kernel and keeps padded batch rows out
    # of the BN statistics.
    col_ok = jnp.arange(L_out_pad) < L_out
    row_ok = jnp.arange(N_pad) < N
    mask = (row_ok[:, None, None] & col_ok[None, None, :]).astype(f32)  # (N_pad,1,L_out_pad)

    # Constant floor-mode pooling matrix: P[j, m] = 1/pool iff j // pool == m,
    # zero outside the valid window (junk conv columns & padded output lanes).
    j = jnp.arange(L_out_pad)[:, None]
    m = jnp.arange(L_pool_pad)[None, :]
    pool_mat = ((j // pool == m) & (m < L_pool)).astype(f32) * (1.0 / pool)

    block_bytes = 4 * (B_TILE * C_in_p * L_pad + B_TILE * L_out_pad
                       + B_TILE * C_out_p * L_pool_pad)
    const_bytes = 4 * (C_out_p * (kernel * C_in_p + 4) + L_out_pad * L_pool_pad)
    vmem_need = slab_bytes + 2 * block_bytes + const_bytes + (2 << 20)
    vmem_limit = int(min(48 * 1024 * 1024, max(32 * 1024 * 1024, vmem_need)))

    grid = (2, NB)   # (phase, batch tile); both "arbitrary" (resident slab + stats).
    # TODO(synk): on v7x a leading parallel core axis with per-core partial BN stats
    # would use both TensorCores; fused/resident design here minimizes HBM traffic.

    out_p = pl.pallas_call(
        partial(_fused_kernel, kernel=kernel, b_tile=B_TILE, l_out_pad=L_out_pad,
                count=N * L_out, matmul_dtype=matmul_dtype),
        grid=grid,
        in_specs=[
            pl.BlockSpec((B_TILE, C_in_p, L_pad), lambda p, n: (n * (1 - p), 0, 0)),
            pl.BlockSpec((C_out_p, kernel * C_in_p), lambda p, n: (0, 0)),
            pl.BlockSpec((C_out_p, 1), lambda p, n: (0, 0)),
            pl.BlockSpec((C_out_p, 1), lambda p, n: (0, 0)),
            pl.BlockSpec((C_out_p, 1), lambda p, n: (0, 0)),
            pl.BlockSpec((B_TILE, 1, L_out_pad), lambda p, n: (n * (1 - p), 0, 0)),
            pl.BlockSpec((L_out_pad, L_pool_pad), lambda p, n: (0, 0)),
        ],
        out_specs=pl.BlockSpec((B_TILE, C_out_p, L_pool_pad),
                               lambda p, n: (n * p, 0, 0)),
        out_shape=jax.ShapeDtypeStruct((N_pad, C_out_p, L_pool_pad), x.dtype),
        scratch_shapes=[
            pltpu.VMEM((N_pad, C_out_p, L_out_pad), f32),   # resident conv slab
            pltpu.VMEM((C_out_p, 1), f32),                  # BN sum
            pltpu.VMEM((C_out_p, 1), f32),                  # BN sum of squares
            pltpu.VMEM((C_out_p, 1), f32),                  # hoisted BN scale
            pltpu.VMEM((C_out_p, 1), f32),                  # hoisted BN shift
        ],
        compiler_params=pltpu.CompilerParams(
            dimension_semantics=("arbitrary", "arbitrary"),
            vmem_limit_bytes=vmem_limit),
        cost_estimate=pl.CostEstimate(
            flops=(2 * N * C_out * C_in * kernel * L_out
                   + 2 * N_pad * C_out_p * L_out_pad * L_pool_pad
                   + 4 * N_pad * C_out_p * L_out_pad),
            transcendentals=C_out_p,
            bytes_accessed=4 * (x_p.size + w_flat.size + mask.size + pool_mat.size
                                + N_pad * C_out_p * L_pool_pad + 6 * C_out_p)),
    )(x_p, w_flat, b_col, g_col, bt_col, mask, pool_mat)

    return out_p[:N, :C_out, :L_pool]


def reference(x, weight, bias, gamma, beta, pool):
    # Pure-JAX reference matching the PyTorch forward (training-mode BatchNorm).
    y = jax.lax.conv_general_dilated(
        x, weight, window_strides=(1,), padding="VALID",
        dimension_numbers=("NCH", "OIH", "NCH"))
    y = y + bias[None, :, None]
    mean = y.mean(axis=(0, 2), keepdims=True)
    var = ((y - mean) ** 2).mean(axis=(0, 2), keepdims=True)
    y = (y - mean) / jnp.sqrt(var + EPS)
    y = y * gamma[None, :, None] + beta[None, :, None]
    y = jnp.maximum(y, 0.0)
    N, C, Lo = y.shape
    Lp = Lo // pool
    return y[:, :, : Lp * pool].reshape(N, C, Lp, pool).mean(axis=-1)


if __name__ == "__main__":
    # Small shapes consistent with the module: Conv1d expects (N, C_in, L).
    N, C_in, C_out, L, K, POOL = 2, 4, 8, 16, 3, 2

    key = jax.random.PRNGKey(0)
    kx, kw, kb = jax.random.split(key, 3)

    x = jax.random.normal(kx, (N, C_in, L), dtype=jnp.float32)

    # Deterministic parameter init (PyTorch-style uniform conv, ones/zeros BN affine).
    bound = 1.0 / jnp.sqrt(C_in * K)
    weight = jax.random.uniform(kw, (C_out, C_in, K), jnp.float32, -bound, bound)
    bias = jax.random.uniform(kb, (C_out,), jnp.float32, -bound, bound)
    gamma = jnp.ones((C_out,), jnp.float32)
    beta = jnp.zeros((C_out,), jnp.float32)

    out = convblock1d(x, weight, bias, gamma, beta, kernel=K, pool=POOL)
    out = jax.block_until_ready(out)

    ref = reference(x, weight, bias, gamma, beta, POOL)
    assert out.shape == (N, C_out, (L - K + 1) // POOL), out.shape
    assert jnp.allclose(out, ref, rtol=1e-4, atol=1e-4), \
        float(jnp.max(jnp.abs(out - ref)))

    print("KERNEL_OK")
</pallas_src>

<mosaic_0001>
module attributes {stable_mosaic.version = 11 : i64} {
  func.func @_fused_kernel(%arg0: i32, %arg1: i32, %arg2: memref<2x8x128xf32, #tpu.memory_space<vmem>>, %arg3: memref<8x24xf32, #tpu.memory_space<vmem>>, %arg4: memref<8x1xf32, #tpu.memory_space<vmem>>, %arg5: memref<8x1xf32, #tpu.memory_space<vmem>>, %arg6: memref<8x1xf32, #tpu.memory_space<vmem>>, %arg7: memref<2x1x128xf32, #tpu.memory_space<vmem>>, %arg8: memref<128x128xf32, #tpu.memory_space<vmem>>, %arg9: memref<2x8x128xf32, #tpu.memory_space<vmem>>, %arg10: memref<2x8x128xf32, #tpu.memory_space<vmem>>, %arg11: memref<8x1xf32, #tpu.memory_space<vmem>>, %arg12: memref<8x1xf32, #tpu.memory_space<vmem>>, %arg13: memref<8x1xf32, #tpu.memory_space<vmem>>, %arg14: memref<8x1xf32, #tpu.memory_space<vmem>>) attributes {dimension_semantics = [#tpu.dimension_semantics<arbitrary>, #tpu.dimension_semantics<arbitrary>], iteration_bounds = array<i64: 2, 1>, scalar_prefetch = 0 : i64, scratch_operands = 5 : i64, tpu.core_type = #tpu.core_type<tc>, window_params = [{transform_indices = @transform_0, window_bounds = array<i64: 2, 8, 128>}, {pipeline_mode = #tpu.pipeline_mode<synchronous>, transform_indices = @transform_1, window_bounds = array<i64: 8, 24>}, {pipeline_mode = #tpu.pipeline_mode<synchronous>, transform_indices = @transform_2, window_bounds = array<i64: 8, 1>}, {pipeline_mode = #tpu.pipeline_mode<synchronous>, transform_indices = @transform_3, window_bounds = array<i64: 8, 1>}, {pipeline_mode = #tpu.pipeline_mode<synchronous>, transform_indices = @transform_4, window_bounds = array<i64: 8, 1>}, {transform_indices = @transform_5, window_bounds = array<i64: 2, 1, 128>}, {pipeline_mode = #tpu.pipeline_mode<synchronous>, transform_indices = @transform_6, window_bounds = array<i64: 128, 128>}, {transform_indices = @transform_7, window_bounds = array<i64: 2, 8, 128>}]} {
    %c2_i32 = arith.constant 2 : i32
    %0 = arith.muli %arg1, %c2_i32 : i32
    %1 = tpu.assume_multiple %0, 2 : i32
    %c0_i32 = arith.constant 0 : i32
    %2 = arith.cmpi eq, %arg0, %c0_i32 : i32
    %3 = arith.extui %2 : i1 to i32
    %c0_i32_0 = arith.constant 0 : i32
    %4 = arith.cmpi ne, %3, %c0_i32_0 : i32
    scf.if %4 {
      %c0_i32_2 = arith.constant 0 : i32
      %8 = arith.cmpi eq, %arg1, %c0_i32_2 : i32
      %9 = arith.extui %8 : i1 to i32
      %c0_i32_3 = arith.constant 0 : i32
      %10 = arith.cmpi ne, %9, %c0_i32_3 : i32
      scf.if %10 {
        %cst_44 = arith.constant 0.000000e+00 : f32
        %70 = vector.broadcast %cst_44 : f32 to vector<8x1xf32>
        %c0_45 = arith.constant 0 : index
        %c0_46 = arith.constant 0 : index
        %71 = vector.load %arg11[%c0_45, %c0_46] : memref<8x1xf32, #tpu.memory_space<vmem>>, vector<8x1xf32>
        tpu.vector_store %arg11[%c0_45, %c0_46], %70 {strides = array<i32>} : memref<8x1xf32, #tpu.memory_space<vmem>>, vector<8x1xf32>,
        %cst_47 = arith.constant 0.000000e+00 : f32
        %72 = vector.broadcast %cst_47 : f32 to vector<8x1xf32>
        %c0_48 = arith.constant 0 : index
        %c0_49 = arith.constant 0 : index
        %73 = vector.load %arg12[%c0_48, %c0_49] : memref<8x1xf32, #tpu.memory_space<vmem>>, vector<8x1xf32>
        tpu.vector_store %arg12[%c0_48, %c0_49], %72 {strides = array<i32>} : memref<8x1xf32, #tpu.memory_space<vmem>>, vector<8x1xf32>,
      } else {
      }
      %c0 = arith.constant 0 : index
      %c0_4 = arith.constant 0 : index
      %c0_5 = arith.constant 0 : index
      %11 = vector.load %arg2[%c0, %c0_4, %c0_5] : memref<2x8x128xf32, #tpu.memory_space<vmem>>, vector<2x8x128xf32>
      %12 = vector.shape_cast %11 : vector<2x8x128xf32> to vector<16x128xf32>
      %c127_i32 = arith.constant 127 : i32
      %13 = tpu.dynamic_rotate %12 by %c127_i32 dim 1 : vector<16x128xf32>, i32 -> vector<16x128xf32>
      %c126_i32 = arith.constant 126 : i32
      %14 = tpu.dynamic_rotate %12 by %c126_i32 dim 1 : vector<16x128xf32>, i32 -> vector<16x128xf32>
      %c0_6 = arith.constant 0 : index
      %c0_7 = arith.constant 0 : index
      %15 = vector.load %arg3[%c0_6, %c0_7] : memref<8x24xf32, #tpu.memory_space<vmem>>, vector<8x24xf32>
      %16 = vector.extract_strided_slice %12 {offsets = [0, 0], sizes = [8, 128], strides = [1, 1]} : vector<16x128xf32> to vector<8x128xf32>
      %17 = vector.extract_strided_slice %13 {offsets = [0, 0], sizes = [8, 128], strides = [1, 1]} : vector<16x128xf32> to vector<8x128xf32>
      %18 = vector.extract_strided_slice %14 {offsets = [0, 0], sizes = [8, 128], strides = [1, 1]} : vector<16x128xf32> to vector<8x128xf32>
      %19 = tpu.concatenate %16, %17, %18 in 0 : vector<8x128xf32>, vector<8x128xf32>, vector<8x128xf32> -> vector<24x128xf32>
      %cst = arith.constant dense<0.000000e+00> : vector<8x128xf32>
      %20 = tpu.matmul %15, %19, %cst {dimension_numbers = #tpu.dot_dimension_numbers<[1], [0], [0], [1], [0, 0, 1, 1], [], []>} : vector<8x24xf32>, vector<24x128xf32>, vector<8x128xf32> -> vector<8x128xf32>
      %c0_8 = arith.constant 0 : index
      %c0_9 = arith.constant 0 : index
      %21 = vector.load %arg4[%c0_8, %c0_9] : memref<8x1xf32, #tpu.memory_space<vmem>>, vector<8x1xf32>
      %22 = vector.broadcast %21 : vector<8x1xf32> to vector<8x128xf32>
      %23 = arith.addf %20, %22 : vector<8x128xf32>
      %24 = vector.shape_cast %23 : vector<8x128xf32> to vector<1x8x128xf32>
      %c0_i32_10 = arith.constant 0 : i32
      %25 = arith.addi %1, %c0_i32_10 : i32
      %26 = arith.index_cast %25 : i32 to index
      %c0_11 = arith.constant 0 : index
      %c0_12 = arith.constant 0 : index
      %27 = vector.load %arg10[%26, %c0_11, %c0_12] : memref<2x8x128xf32, #tpu.memory_space<vmem>>, vector<1x8x128xf32>
      tpu.vector_store %arg10[%26, %c0_11, %c0_12], %24 {strides = array<i32>} : memref<2x8x128xf32, #tpu.memory_space<vmem>>, vector<1x8x128xf32>,
      %c0_13 = arith.constant 0 : index
      %c0_14 = arith.constant 0 : index
      %c0_15 = arith.constant 0 : index
      %28 = vector.load %arg7[%c0_13, %c0_14, %c0_15] : memref<2x1x128xf32, #tpu.memory_space<vmem>>, vector<1x1x128xf32>
      %29 = vector.shape_cast %28 : vector<1x1x128xf32> to vector<1x128xf32>
      %30 = vector.broadcast %29 : vector<1x128xf32> to vector<8x128xf32>
      %31 = arith.mulf %23, %30 : vector<8x128xf32>
      %c0_16 = arith.constant 0 : index
      %c0_17 = arith.constant 0 : index
      %32 = vector.load %arg11[%c0_16, %c0_17] : memref<8x1xf32, #tpu.memory_space<vmem>>, vector<8x1xf32>
      %cst_18 = arith.constant dense<0.000000e+00> : vector<8xf32>
      %33 = vector.multi_reduction <add>, %31, %cst_18 [1] : vector<8x128xf32> to vector<8xf32>
      %34 = vector.shape_cast %33 : vector<8xf32> to vector<8x1xf32>
      %35 = arith.addf %32, %34 : vector<8x1xf32>
      %c0_19 = arith.constant 0 : index
      %c0_20 = arith.constant 0 : index
      %36 = vector.load %arg11[%c0_19, %c0_20] : memref<8x1xf32, #tpu.memory_space<vmem>>, vector<8x1xf32>
      tpu.vector_store %arg11[%c0_19, %c0_20], %35 {strides = array<i32>} : memref<8x1xf32, #tpu.memory_space<vmem>>, vector<8x1xf32>,
      %c0_21 = arith.constant 0 : index
      %c0_22 = arith.constant 0 : index
      %37 = vector.load %arg12[%c0_21, %c0_22] : memref<8x1xf32, #tpu.memory_space<vmem>>, vector<8x1xf32>
      %38 = arith.mulf %31, %31 : vector<8x128xf32>
      %cst_23 = arith.constant dense<0.000000e+00> : vector<8xf32>
      %39 = vector.multi_reduction <add>, %38, %cst_23 [1] : vector<8x128xf32> to vector<8xf32>
      %40 = vector.shape_cast %39 : vector<8xf32> to vector<8x1xf32>
      %41 = arith.addf %37, %40 : vector<8x1xf32>
      %c0_24 = arith.constant 0 : index
      %c0_25 = arith.constant 0 : index
      %42 = vector.load %arg12[%c0_24, %c0_25] : memref<8x1xf32, #tpu.memory_space<vmem>>, vector<8x1xf32>
      tpu.vector_store %arg12[%c0_24, %c0_25], %41 {strides = array<i32>} : memref<8x1xf32, #tpu.memory_space<vmem>>, vector<8x1xf32>,
      %43 = vector.extract_strided_slice %12 {offsets = [8, 0], sizes = [8, 128], strides = [1, 1]} : vector<16x128xf32> to vector<8x128xf32>
      %44 = vector.extract_strided_slice %13 {offsets = [8, 0], sizes = [8, 128], strides = [1, 1]} : vector<16x128xf32> to vector<8x128xf32>
      %45 = vector.extract_strided_slice %14 {offsets = [8, 0], sizes = [8, 128], strides = [1, 1]} : vector<16x128xf32> to vector<8x128xf32>
      %46 = tpu.concatenate %43, %44, %45 in 0 : vector<8x128xf32>, vector<8x128xf32>, vector<8x128xf32> -> vector<24x128xf32>
      %cst_26 = arith.constant dense<0.000000e+00> : vector<8x128xf32>
      %47 = tpu.matmul %15, %46, %cst_26 {dimension_numbers = #tpu.dot_dimension_numbers<[1], [0], [0], [1], [0, 0, 1, 1], [], []>} : vector<8x24xf32>, vector<24x128xf32>, vector<8x128xf32> -> vector<8x128xf32>
      %c0_27 = arith.constant 0 : index
      %c0_28 = arith.constant 0 : index
      %48 = vector.load %arg4[%c0_27, %c0_28] : memref<8x1xf32, #tpu.memory_space<vmem>>, vector<8x1xf32>
      %49 = vector.broadcast %48 : vector<8x1xf32> to vector<8x128xf32>
      %50 = arith.addf %47, %49 : vector<8x128xf32>
      %51 = vector.shape_cast %50 : vector<8x128xf32> to vector<1x8x128xf32>
      %c1_i32_29 = arith.constant 1 : i32
      %52 = arith.addi %1, %c1_i32_29 : i32
      %53 = arith.index_cast %52 : i32 to index
      %c0_30 = arith.constant 0 : index
      %c0_31 = arith.constant 0 : index
      %54 = vector.load %arg10[%53, %c0_30, %c0_31] : memref<2x8x128xf32, #tpu.memory_space<vmem>>, vector<1x8x128xf32>
      tpu.vector_store %arg10[%53, %c0_30, %c0_31], %51 {strides = array<i32>} : memref<2x8x128xf32, #tpu.memory_space<vmem>>, vector<1x8x128xf32>,
      %c1 = arith.constant 1 : index
      %c0_32 = arith.constant 0 : index
      %c0_33 = arith.constant 0 : index
      %55 = vector.load %arg7[%c1, %c0_32, %c0_33] : memref<2x1x128xf32, #tpu.memory_space<vmem>>, vector<1x1x128xf32>
      %56 = vector.shape_cast %55 : vector<1x1x128xf32> to vector<1x128xf32>
      %57 = vector.broadcast %56 : vector<1x128xf32> to vector<8x128xf32>
      %58 = arith.mulf %50, %57 : vector<8x128xf32>
      %c0_34 = arith.constant 0 : index
      %c0_35 = arith.constant 0 : index
      %59 = vector.load %arg11[%c0_34, %c0_35] : memref<8x1xf32, #tpu.memory_space<vmem>>, vector<8x1xf32>
      %cst_36 = arith.constant dense<0.000000e+00> : vector<8xf32>
      %60 = vector.multi_reduction <add>, %58, %cst_36 [1] : vector<8x128xf32> to vector<8xf32>
      %61 = vector.shape_cast %60 : vector<8xf32> to vector<8x1xf32>
      %62 = arith.addf %59, %61 : vector<8x1xf32>
      %c0_37 = arith.constant 0 : index
      %c0_38 = arith.constant 0 : index
      %63 = vector.load %arg11[%c0_37, %c0_38] : memref<8x1xf32, #tpu.memory_space<vmem>>, vector<8x1xf32>
      tpu.vector_store %arg11[%c0_37, %c0_38], %62 {strides = array<i32>} : memref<8x1xf32, #tpu.memory_space<vmem>>, vector<8x1xf32>,
      %c0_39 = arith.constant 0 : index
      %c0_40 = arith.constant 0 : index
      %64 = vector.load %arg12[%c0_39, %c0_40] : memref<8x1xf32, #tpu.memory_space<vmem>>, vector<8x1xf32>
      %65 = arith.mulf %58, %58 : vector<8x128xf32>
      %cst_41 = arith.constant dense<0.000000e+00> : vector<8xf32>
      %66 = vector.multi_reduction <add>, %65, %cst_41 [1] : vector<8x128xf32> to vector<8xf32>
      %67 = vector.shape_cast %66 : vector<8xf32> to vector<8x1xf32>
      %68 = arith.addf %64, %67 : vector<8x1xf32>
      %c0_42 = arith.constant 0 : index
      %c0_43 = arith.constant 0 : index
      %69 = vector.load %arg12[%c0_42, %c0_43] : memref<8x1xf32, #tpu.memory_space<vmem>>, vector<8x1xf32>
      tpu.vector_store %arg12[%c0_42, %c0_43], %68 {strides = array<i32>} : memref<8x1xf32, #tpu.memory_space<vmem>>, vector<8x1xf32>,
    } else {
    }
    %c1_i32 = arith.constant 1 : i32
    %5 = arith.cmpi eq, %arg0, %c1_i32 : i32
    %6 = arith.extui %5 : i1 to i32
    %c0_i32_1 = arith.constant 0 : i32
    %7 = arith.cmpi ne, %6, %c0_i32_1 : i32
    scf.if %7 {
      %c0_i32_2 = arith.constant 0 : i32
      %8 = arith.cmpi eq, %arg1, %c0_i32_2 : i32
      %9 = arith.extui %8 : i1 to i32
      %c0_i32_3 = arith.constant 0 : i32
      %10 = arith.cmpi ne, %9, %c0_i32_3 : i32
      scf.if %10 {
        %c0_15 = arith.constant 0 : index
        %c0_16 = arith.constant 0 : index
        %28 = vector.load %arg11[%c0_15, %c0_16] : memref<8x1xf32, #tpu.memory_space<vmem>>, vector<8x1xf32>
        %cst_17 = arith.constant 0.0357142873 : f32
        %29 = vector.broadcast %cst_17 : f32 to vector<8x1xf32>
        %30 = arith.mulf %28, %29 : vector<8x1xf32>
        %c0_18 = arith.constant 0 : index
        %c0_19 = arith.constant 0 : index
        %31 = vector.load %arg12[%c0_18, %c0_19] : memref<8x1xf32, #tpu.memory_space<vmem>>, vector<8x1xf32>
        %cst_20 = arith.constant 0.0357142873 : f32
        %32 = vector.broadcast %cst_20 : f32 to vector<8x1xf32>
        %33 = arith.mulf %31, %32 : vector<8x1xf32>
        %34 = arith.mulf %30, %30 : vector<8x1xf32>
        %35 = arith.subf %33, %34 : vector<8x1xf32>
        %cst_21 = arith.constant 0.000000e+00 : f32
        %36 = vector.broadcast %cst_21 : f32 to vector<8x1xf32>
        %37 = arith.maximumf %35, %36 : vector<8x1xf32>
        %c0_22 = arith.constant 0 : index
        %c0_23 = arith.constant 0 : index
        %38 = vector.load %arg5[%c0_22, %c0_23] : memref<8x1xf32, #tpu.memory_space<vmem>>, vector<8x1xf32>
        %cst_24 = arith.constant 9.99999974E-6 : f32
        %39 = vector.broadcast %cst_24 : f32 to vector<8x1xf32>
        %40 = arith.addf %37, %39 : vector<8x1xf32>
        %41 = math.rsqrt %40 : vector<8x1xf32>
        %42 = arith.mulf %38, %41 : vector<8x1xf32>
        %c0_25 = arith.constant 0 : index
        %c0_26 = arith.constant 0 : index
        %43 = vector.load %arg13[%c0_25, %c0_26] : memref<8x1xf32, #tpu.memory_space<vmem>>, vector<8x1xf32>
        tpu.vector_store %arg13[%c0_25, %c0_26], %42 {strides = array<i32>} : memref<8x1xf32, #tpu.memory_space<vmem>>, vector<8x1xf32>,
        %c0_27 = arith.constant 0 : index
        %c0_28 = arith.constant 0 : index
        %44 = vector.load %arg6[%c0_27, %c0_28] : memref<8x1xf32, #tpu.memory_space<vmem>>, vector<8x1xf32>
        %c0_29 = arith.constant 0 : index
        %c0_30 = arith.constant 0 : index
        %45 = vector.load %arg13[%c0_29, %c0_30] : memref<8x1xf32, #tpu.memory_space<vmem>>, vector<8x1xf32>
        %46 = arith.mulf %30, %45 : vector<8x1xf32>
        %47 = arith.subf %44, %46 : vector<8x1xf32>
        %c0_31 = arith.constant 0 : index
        %c0_32 = arith.constant 0 : index
        %48 = vector.load %arg14[%c0_31, %c0_32] : memref<8x1xf32, #tpu.memory_space<vmem>>, vector<8x1xf32>
        tpu.vector_store %arg14[%c0_31, %c0_32], %47 {strides = array<i32>} : memref<8x1xf32, #tpu.memory_space<vmem>>, vector<8x1xf32>,
      } else {
      }
      %11 = arith.index_cast %1 : i32 to index
      %c0 = arith.constant 0 : index
      %c0_4 = arith.constant 0 : index
      %12 = vector.load %arg10[%11, %c0, %c0_4] : memref<2x8x128xf32, #tpu.memory_space<vmem>>, vector<2x8x128xf32>
      %c0_5 = arith.constant 0 : index
      %c0_6 = arith.constant 0 : index
      %13 = vector.load %arg13[%c0_5, %c0_6] : memref<8x1xf32, #tpu.memory_space<vmem>>, vector<8x1xf32>
      %14 = vector.shape_cast %13 : vector<8x1xf32> to vector<1x8x1xf32>
      %15 = vector.broadcast %14 : vector<1x8x1xf32> to vector<2x8x128xf32>
      %16 = arith.mulf %12, %15 : vector<2x8x128xf32>
      %c0_7 = arith.constant 0 : index
      %c0_8 = arith.constant 0 : index
      %17 = vector.load %arg14[%c0_7, %c0_8] : memref<8x1xf32, #tpu.memory_space<vmem>>, vector<8x1xf32>
      %18 = vector.shape_cast %17 : vector<8x1xf32> to vector<1x8x1xf32>
      %19 = vector.broadcast %18 : vector<1x8x1xf32> to vector<2x8x128xf32>
      %20 = arith.addf %16, %19 : vector<2x8x128xf32>
      %cst = arith.constant 0.000000e+00 : f32
      %21 = vector.broadcast %cst : f32 to vector<2x8x128xf32>
      %22 = arith.maximumf %20, %21 : vector<2x8x128xf32>
      %23 = vector.shape_cast %22 : vector<2x8x128xf32> to vector<16x128xf32>
      %c0_9 = arith.constant 0 : index
      %c0_10 = arith.constant 0 : index
      %24 = vector.load %arg8[%c0_9, %c0_10] : memref<128x128xf32, #tpu.memory_space<vmem>>, vector<128x128xf32>
      %cst_11 = arith.constant dense<0.000000e+00> : vector<16x128xf32>
      %25 = tpu.matmul %23, %24, %cst_11 {dimension_numbers = #tpu.dot_dimension_numbers<[1], [0], [0], [1], [0, 0, 1, 1], [], []>} : vector<16x128xf32>, vector<128x128xf32>, vector<16x128xf32> -> vector<16x128xf32>
      %26 = vector.shape_cast %25 : vector<16x128xf32> to vector<2x8x128xf32>
      %c0_12 = arith.constant 0 : index
      %c0_13 = arith.constant 0 : index
      %c0_14 = arith.constant 0 : index
      %27 = vector.load %arg9[%c0_12, %c0_13, %c0_14] : memref<2x8x128xf32, #tpu.memory_space<vmem>>, vector<2x8x128xf32>
      tpu.vector_store %arg9[%c0_12, %c0_13, %c0_14], %26 {strides = array<i32>} : memref<2x8x128xf32, #tpu.memory_space<vmem>>, vector<2x8x128xf32>,
    } else {
    }
    return
  }
  func.func @transform_0(%arg0: i32, %arg1: i32) -> (i32, i32, i32) {
    %c1_i32 = arith.constant 1 : i32
    %0 = arith.subi %c1_i32, %arg0 : i32
    %1 = arith.muli %arg1, %0 : i32
    %c0_i32 = arith.constant 0 : i32
    %c0_i32_0 = arith.constant 0 : i32
    %c0_i32_1 = arith.constant 0 : i32
    return %1, %c0_i32, %c0_i32_0 : i32, i32, i32
  }
  func.func @transform_1(%arg0: i32, %arg1: i32) -> (i32, i32) {
    %c0_i32 = arith.constant 0 : i32
    %c0_i32_0 = arith.constant 0 : i32
    %c0_i32_1 = arith.constant 0 : i32
    return %c0_i32, %c0_i32_0 : i32, i32
  }
  func.func @transform_2(%arg0: i32, %arg1: i32) -> (i32, i32) {
    %c0_i32 = arith.constant 0 : i32
    %c0_i32_0 = arith.constant 0 : i32
    %c0_i32_1 = arith.constant 0 : i32
    return %c0_i32, %c0_i32_0 : i32, i32
  }
  func.func @transform_3(%arg0: i32, %arg1: i32) -> (i32, i32) {
    %c0_i32 = arith.constant 0 : i32
    %c0_i32_0 = arith.constant 0 : i32
    %c0_i32_1 = arith.constant 0 : i32
    return %c0_i32, %c0_i32_0 : i32, i32
  }
  func.func @transform_4(%arg0: i32, %arg1: i32) -> (i32, i32) {
    %c0_i32 = arith.constant 0 : i32
    %c0_i32_0 = arith.constant 0 : i32
    %c0_i32_1 = arith.constant 0 : i32
    return %c0_i32, %c0_i32_0 : i32, i32
  }
  func.func @transform_5(%arg0: i32, %arg1: i32) -> (i32, i32, i32) {
    %c1_i32 = arith.constant 1 : i32
    %0 = arith.subi %c1_i32, %arg0 : i32
    %1 = arith.muli %arg1, %0 : i32
    %c0_i32 = arith.constant 0 : i32
    %c0_i32_0 = arith.constant 0 : i32
    %c0_i32_1 = arith.constant 0 : i32
    return %1, %c0_i32, %c0_i32_0 : i32, i32, i32
  }
  func.func @transform_6(%arg0: i32, %arg1: i32) -> (i32, i32) {
    %c0_i32 = arith.constant 0 : i32
    %c0_i32_0 = arith.constant 0 : i32
    %c0_i32_1 = arith.constant 0 : i32
    return %c0_i32, %c0_i32_0 : i32, i32
  }
  func.func @transform_7(%arg0: i32, %arg1: i32) -> (i32, i32, i32) {
    %0 = arith.muli %arg1, %arg0 : i32
    %c0_i32 = arith.constant 0 : i32
    %c0_i32_0 = arith.constant 0 : i32
    %c0_i32_1 = arith.constant 0 : i32
    return %0, %c0_i32, %c0_i32_0 : i32, i32, i32
  }
}

</mosaic_0001>

<llo_original>
// kernel: tpu_custom_call.1
$region0: #{tpu_custom_call.1}
  #allocation0 [shape = 'u32[]', space=smem, size = 0x4, offset = 0x4, fixed_abs, tag = 'smem constant byte address 0x4 - core index']
  #allocation1 [shape = 'u32[144,128]{1,0:T(1,128)}', space=vmem, size = 0x12000, scoped, tag = 'internal scratch']
  #allocation2 [shape = 'f32[2,8,128]{2,1,0:T(8,128)}', space=vmem, size = 0x2000, scoped, tag = 'scratch operand']
  #allocation3 [shape = 'f32[8,1]{1,0:T(8,128)}', space=vmem, size = 0x1000, scoped, tag = 'scratch operand']
  #allocation4 [shape = 'f32[8,1]{1,0:T(8,128)}', space=vmem, size = 0x1000, scoped, tag = 'scratch operand']
  #allocation5 [shape = 'f32[8,1]{1,0:T(8,128)}', space=vmem, size = 0x1000, scoped, tag = 'scratch operand']
  #allocation6 [shape = 'f32[8,1]{1,0:T(8,128)}', space=vmem, size = 0x1000, scoped, tag = 'scratch operand']
  %s0 = inlined_call_operand.vmem [shape: f32[2,8,128], index: 0, kind: input, shape index: {}]
  %s1 = inlined_call_operand.vmem [shape: f32[8,24], index: 1, kind: input, shape index: {}]
  %s2 = inlined_call_operand.vmem [shape: f32[8,1], index: 2, kind: input, shape index: {}]
  %s3 = inlined_call_operand.vmem [shape: f32[8,1], index: 3, kind: input, shape index: {}]
  %s4 = inlined_call_operand.vmem [shape: f32[8,1], index: 4, kind: input, shape index: {}]
  %s5 = inlined_call_operand.vmem [shape: f32[2,1,128], index: 5, kind: input, shape index: {}]
  %s6 = inlined_call_operand.hbm [shape: f32[128,128], index: 6, kind: input, shape index: {}]
  %s7 = inlined_call_operand.hbm [shape: f32[2,8,128], index: 7, kind: output, shape index: {}]
  %s8 = sld [smem:[#allocation0]]
  $region81: #{tpu_custom_call.1} parent=0
    _
  %s10 = ssub.s32 1, %s8
  %s11 = scalar_select 0, %s10, %s8
  $region1: #{tpu_custom_call.1} parent=0
    #allocation7 [shape = 'u8[65536]{0}', space=vmem, size = 0x10000, scoped, tag = 'input window, operand 6, single buffered']
    #allocation8 [shape = 's32[2]{0}', space=sflag, size = 0x8, scoped, tag = 'scoped memory for tpu_custom_call.1']
    #allocation9 [shape = 's32[2]{0}', space=sflag, size = 0x8, scoped, tag = 'scoped memory for tpu_custom_call.1']
    #allocation10 [shape = 'u8[16384]{0}', space=vmem, size = 0x4000, scoped, tag = 'output window, operand 0']
    %12 = vsyncpa [#allocation8], 0
    %13 = vsyncpa [#allocation9], 0
    %s14 = scalar_lea.sflag [#allocation9], 1
    %15 = vsyncpa %s14, 0
    loop: start=0, step=1, limit=4
    $region2: #{tpu_custom_call.1} parent=1 // loop_pre_header
      _
    $region3: #{tpu_custom_call.1} parent=1 // loop_header
      %s17 = sphi 0, %s21
      %p18 = scmp.ge.s32.totalorder %s17, 4
      %s24 = sphi 0, %s36
      %s25 = sphi 0, %s32
      %s26 = sphi 0, %s24
      %s27 = sphi 0, %s25
      %s28 = sphi 0, %s26
      %s29 = sphi 0, %s27
      %s43 = sphi 0, %s45
      %s46 = sphi 0, %s43
      %s47 = sphi 0, %s46
      %s63 = sphi 0, %s47
      %s67 = sphi 0, %s67
      %s69 = sphi 0, %s67
      %s70 = sphi 0, %s69
      %s84 = sphi 0, %s70
      %s88 = sphi 0, %s88
      %s90 = sphi 0, %s88
      %s91 = sphi 0, %s90
      %s105 = sphi 0, %s91
      %s109 = sphi 0, %s109
      %s111 = sphi 0, %s109
      %s112 = sphi 0, %s111
      %s126 = sphi 0, %s112
      %s130 = sphi 0, %s130
      %s132 = sphi 0, %s130
      %s133 = sphi 0, %s132
      %s147 = sphi 0, %s133
      %s157 = sphi 0, %s159
      %s160 = sphi 0, %s157
      %s161 = sphi 0, %s160
      %s177 = sphi 0, %s161
      %s181 = sphi 0, %s181
      %s183 = sphi 0, %s181
      %s184 = sphi 0, %s183
      %s198 = sphi 0, %s184
      %s206 = sphi 0, %s208
      %s209 = sphi 0, %s206
      %s210 = sphi 0, %s209
      %s226 = sphi 0, %s210
    $region4: #{tpu_custom_call.1} parent=1 // loop_header_branch
      %20 = sbr.rel (%p18) target = $region8
    $region5: #{tpu_custom_call.1} parent=1 // loop_body
      %s22 = ssub.s32 %s17, 1
      %s23 = ssub.s32 %s17, 2
      %s30 = sadd.s32 1, %s25
      %p31 = scmp.ge.s32.totalorder %s30, 1
      %s32 = scalar_select %p31, 0, %s30
      %s33 = sadd.s32 1, %s24
      %s34 = scalar_select %p31, %s33, %s24
      %p35 = scmp.ge.s32.totalorder %s34, 2
      %s36 = scalar_select %p35, 0, %s34
      %s37 = ssub.s32 1, %s24
      %s38 = smul.u32 %s25, %s37
      %s39 = ssub.s32 1, %s36
      %s40 = smul.u32 %s32, %s39
      %s41 = ssub.s32 %s38, %s40
      %p42 = scmp.eq.s32.totalorder %s41, 0
      %s44 = sadd.s32 %s43, 1
      %s45 = scalar_select %p42, %s43, %s44
      %p48 = pneg %p42
      %p49 = scmp.eq.s32.totalorder %s17, 1
      %p50 = por %p48, %p49
      %p51 = scmp.ne.s32.totalorder %s43, %s46
      %p52 = scmp.eq.s32.totalorder %s17, 0
      %p53 = por %p51, %p52
      %p54 = scmp.ne.s32.totalorder %s43, %s46
      %p55 = scmp.eq.s32.totalorder %s22, 1
      %p56 = por %p54, %p55
      %p57 = scmp.ne.s32.totalorder %s46, %s47
      %p58 = scmp.eq.s32.totalorder %s22, 0
      %p59 = por %p57, %p58
      %p60 = scmp.ne.s32.totalorder %s46, %s47
      %p61 = scmp.eq.s32.totalorder %s23, 1
      %p62 = por %p60, %p61
      %p64 = scmp.ne.s32.totalorder %s47, %s63
      %p65 = scmp.eq.s32.totalorder %s23, 0
      %p66 = por %p64, %p65
      %s68 = sadd.s32 %s67, 1
      %p71 = scmp.eq.s32.totalorder %s17, 1
      %p72 = scmp.ne.s32.totalorder %s67, %s69
      %p73 = scmp.eq.s32.totalorder %s17, 0
      %p74 = por %p72, %p73
      %p75 = scmp.ne.s32.totalorder %s67, %s69
      %p76 = scmp.eq.s32.totalorder %s22, 1
      %p77 = por %p75, %p76
      %p78 = scmp.ne.s32.totalorder %s69, %s70
      %p79 = scmp.eq.s32.totalorder %s22, 0
      %p80 = por %p78, %p79
      %p81 = scmp.ne.s32.totalorder %s69, %s70
      %p82 = scmp.eq.s32.totalorder %s23, 1
      %p83 = por %p81, %p82
      %p85 = scmp.ne.s32.totalorder %s70, %s84
      %p86 = scmp.eq.s32.totalorder %s23, 0
      %p87 = por %p85, %p86
      %s89 = sadd.s32 %s88, 1
      %p92 = scmp.eq.s32.totalorder %s17, 1
      %p93 = scmp.ne.s32.totalorder %s88, %s90
      %p94 = scmp.eq.s32.totalorder %s17, 0
      %p95 = por %p93, %p94
      %p96 = scmp.ne.s32.totalorder %s88, %s90
      %p97 = scmp.eq.s32.totalorder %s22, 1
      %p98 = por %p96, %p97
      %p99 = scmp.ne.s32.totalorder %s90, %s91
      %p100 = scmp.eq.s32.totalorder %s22, 0
      %p101 = por %p99, %p100
      %p102 = scmp.ne.s32.totalorder %s90, %s91
      %p103 = scmp.eq.s32.totalorder %s23, 1
      %p104 = por %p102, %p103
      %p106 = scmp.ne.s32.totalorder %s91, %s105
      %p107 = scmp.eq.s32.totalorder %s23, 0
      %p108 = por %p106, %p107
      %s110 = sadd.s32 %s109, 1
      %p113 = scmp.eq.s32.totalorder %s17, 1
      %p114 = scmp.ne.s32.totalorder %s109, %s111
      %p115 = scmp.eq.s32.totalorder %s17, 0
      %p116 = por %p114, %p115
      %p117 = scmp.ne.s32.totalorder %s109, %s111
      %p118 = scmp.eq.s32.totalorder %s22, 1
      %p119 = por %p117, %p118
      %p120 = scmp.ne.s32.totalorder %s111, %s112
      %p121 = scmp.eq.s32.totalorder %s22, 0
      %p122 = por %p120, %p121
      %p123 = scmp.ne.s32.totalorder %s111, %s112
      %p124 = scmp.eq.s32.totalorder %s23, 1
      %p125 = por %p123, %p124
      %p127 = scmp.ne.s32.totalorder %s112, %s126
      %p128 = scmp.eq.s32.totalorder %s23, 0
      %p129 = por %p127, %p128
      %s131 = sadd.s32 %s130, 1
      %p134 = scmp.eq.s32.totalorder %s17, 1
      %p135 = scmp.ne.s32.totalorder %s130, %s132
      %p136 = scmp.eq.s32.totalorder %s17, 0
      %p137 = por %p135, %p136
      %p138 = scmp.ne.s32.totalorder %s130, %s132
      %p139 = scmp.eq.s32.totalorder %s22, 1
      %p140 = por %p138, %p139
      %p141 = scmp.ne.s32.totalorder %s132, %s133
      %p142 = scmp.eq.s32.totalorder %s22, 0
      %p143 = por %p141, %p142
      %p144 = scmp.ne.s32.totalorder %s132, %s133
      %p145 = scmp.eq.s32.totalorder %s23, 1
      %p146 = por %p144, %p145
      %p148 = scmp.ne.s32.totalorder %s133, %s147
      %p149 = scmp.eq.s32.totalorder %s23, 0
      %p150 = por %p148, %p149
      %s151 = ssub.s32 1, %s24
      %s152 = smul.u32 %s25, %s151
      %s153 = ssub.s32 1, %s36
      %s154 = smul.u32 %s32, %s153
      %s155 = ssub.s32 %s152, %s154
      %p156 = scmp.eq.s32.totalorder %s155, 0
      %s158 = sadd.s32 %s157, 1
      %s159 = scalar_select %p156, %s157, %s158
      %p162 = pneg %p156
      %p163 = scmp.eq.s32.totalorder %s17, 1
      %p164 = por %p162, %p163
      %p165 = scmp.ne.s32.totalorder %s157, %s160
      %p166 = scmp.eq.s32.totalorder %s17, 0
      %p167 = por %p165, %p166
      %p168 = scmp.ne.s32.totalorder %s157, %s160
      %p169 = scmp.eq.s32.totalorder %s22, 1
      %p170 = por %p168, %p169
      %p171 = scmp.ne.s32.totalorder %s160, %s161
      %p172 = scmp.eq.s32.totalorder %s22, 0
      %p173 = por %p171, %p172
      %p174 = scmp.ne.s32.totalorder %s160, %s161
      %p175 = scmp.eq.s32.totalorder %s23, 1
      %p176 = por %p174, %p175
      %p178 = scmp.ne.s32.totalorder %s161, %s177
      %p179 = scmp.eq.s32.totalorder %s23, 0
      %p180 = por %p178, %p179
      %s182 = sadd.s32 %s181, 1
      %p185 = scmp.eq.s32.totalorder %s17, 1
      %p186 = scmp.ne.s32.totalorder %s181, %s183
      %p187 = scmp.eq.s32.totalorder %s17, 0
      %p188 = por %p186, %p187
      %p189 = scmp.ne.s32.totalorder %s181, %s183
      %p190 = scmp.eq.s32.totalorder %s22, 1
      %p191 = por %p189, %p190
      %p192 = scmp.ne.s32.totalorder %s183, %s184
      %p193 = scmp.eq.s32.totalorder %s22, 0
      %p194 = por %p192, %p193
      %p195 = scmp.ne.s32.totalorder %s183, %s184
      %p196 = scmp.eq.s32.totalorder %s23, 1
      %p197 = por %p195, %p196
      %p199 = scmp.ne.s32.totalorder %s184, %s198
      %p200 = scmp.eq.s32.totalorder %s23, 0
      %p201 = por %p199, %p200
      %s202 = smul.u32 %s25, %s24
      %s203 = smul.u32 %s32, %s36
      %s204 = ssub.s32 %s202, %s203
      %p205 = scmp.eq.s32.totalorder %s204, 0
      %s207 = sadd.s32 %s206, 1
      %s208 = scalar_select %p205, %s206, %s207
      %p211 = pneg %p205
      %p212 = scmp.eq.s32.totalorder %s17, 1
      %p213 = por %p211, %p212
      %p214 = scmp.ne.s32.totalorder %s206, %s209
      %p215 = scmp.eq.s32.totalorder %s17, 0
      %p216 = por %p214, %p215
      %p217 = scmp.ne.s32.totalorder %s206, %s209
      %p218 = scmp.eq.s32.totalorder %s22, 1
      %p219 = por %p217, %p218
      %p220 = scmp.ne.s32.totalorder %s209, %s210
      %p221 = scmp.eq.s32.totalorder %s22, 0
      %p222 = por %p220, %p221
      %p223 = scmp.ne.s32.totalorder %s209, %s210
      %p224 = scmp.eq.s32.totalorder %s23, 1
      %p225 = por %p223, %p224
      %p227 = scmp.ne.s32.totalorder %s210, %s226
      %p228 = scmp.eq.s32.totalorder %s23, 0
      %p229 = por %p227, %p228
      %p230 = scmp.le.s32.totalorder 1, %s17
      %p231 = scmp.lt.s32.totalorder %s17, 3
      %p232 = pnand %p230, %p231
      %p233 = pneg %p232
      // Predicated region
      $region9: #{tpu_custom_call.1} parent=5 // pred_check
        _
      $region10: #{tpu_custom_call.1} parent=5 // pred_check_branch
        %235 = sbr.rel (%p232) target = $region12
      $region11: #{tpu_custom_call.1} parent=5 // pred_region
        %s236 = ssub.s32 %s17, 1
        // Predicated region
        $region13: #{tpu_custom_call.1} parent=11 // pred_check
          %p237 = pneg %p80
        $region14: #{tpu_custom_call.1} parent=11 // pred_check_branch
          %239 = sbr.rel (%p237) target = $region16
        $region15: #{tpu_custom_call.1} parent=11 // pred_region
          _
        $region16: #{tpu_custom_call.1} parent=11 // pred_fallthru
          _
        // Predicated region
        $region17: #{tpu_custom_call.1} parent=11 // pred_check
          %p240 = pneg %p101
        $region18: #{tpu_custom_call.1} parent=11 // pred_check_branch
          %242 = sbr.rel (%p240) target = $region20
        $region19: #{tpu_custom_call.1} parent=11 // pred_region
          _
        $region20: #{tpu_custom_call.1} parent=11 // pred_fallthru
          _
        // Predicated region
        $region21: #{tpu_custom_call.1} parent=11 // pred_check
          %p243 = pneg %p122
        $region22: #{tpu_custom_call.1} parent=11 // pred_check_branch
          %245 = sbr.rel (%p243) target = $region24
        $region23: #{tpu_custom_call.1} parent=11 // pred_region
          _
        $region24: #{tpu_custom_call.1} parent=11 // pred_fallthru
          _
        // Predicated region
        $region25: #{tpu_custom_call.1} parent=11 // pred_check
          %p246 = pneg %p143
        $region26: #{tpu_custom_call.1} parent=11 // pred_check_branch
          %248 = sbr.rel (%p246) target = $region28
        $region27: #{tpu_custom_call.1} parent=11 // pred_region
          _
        $region28: #{tpu_custom_call.1} parent=11 // pred_fallthru
          _
        // Predicated region
        $region29: #{tpu_custom_call.1} parent=11 // pred_check
          %p249 = pneg %p194
        $region30: #{tpu_custom_call.1} parent=11 // pred_check_branch
          %251 = sbr.rel (%p249) target = $region32
        $region31: #{tpu_custom_call.1} parent=11 // pred_region
          %s253 = ssub.s32 2048, 2048
          %254 = vsyncadd [#allocation8], %s253
          %s255 = sshll.u32 [#allocation7], 4
          %s256 = int_to_ptr.vmem [resolvable:$true] %s255
          %261 = dma.hbm_to_vmem [thread:$0]  %s6, 2048, %s256, [#allocation8], 128, 128, 8
        $region32: #{tpu_custom_call.1} parent=11 // pred_fallthru
          _
      $region12: #{tpu_custom_call.1} parent=5 // pred_fallthru
        _
      %p262 = scmp.lt.s32.totalorder %s17, 2
      // Predicated region
      $region33: #{tpu_custom_call.1} parent=5 // pred_check
        %p263 = pneg %p262
      $region34: #{tpu_custom_call.1} parent=5 // pred_check_branch
        %265 = sbr.rel (%p263) target = $region36
      $region35: #{tpu_custom_call.1} parent=5 // pred_region
        // Predicated region
        $region37: #{tpu_custom_call.1} parent=35 // pred_check
          %p266 = pneg %p53
        $region38: #{tpu_custom_call.1} parent=35 // pred_check_branch
          %268 = sbr.rel (%p266) target = $region40
        $region39: #{tpu_custom_call.1} parent=35 // pred_region
          %s269 = ssub.s32 1, %s24
          %s270 = smul.u32 %s25, %s269
          %s271 = smul.u32 2, %s270
          %p272 = scmp.lt.s32.totalorder %s271, 1
          %s273 = scalar_select %p272, %s271, 1
          %s274 = smul.addr %s273, 8
          %s275 = scalar_lea.vmem %s0, %s274
          %s276 = ssub.s32 1, %s24
          %s277 = smul.u32 %s25, %s276
          %s278 = smul.u32 2, %s277
        $region40: #{tpu_custom_call.1} parent=35 // pred_fallthru
          _
        // Predicated region
        $region41: #{tpu_custom_call.1} parent=35 // pred_check
          %p279 = pneg %p167
        $region42: #{tpu_custom_call.1} parent=35 // pred_check_branch
          %281 = sbr.rel (%p279) target = $region44
        $region43: #{tpu_custom_call.1} parent=35 // pred_region
          %s282 = ssub.s32 1, %s24
          %s283 = smul.u32 %s25, %s282
          %s284 = smul.u32 2, %s283
          %p285 = scmp.lt.s32.totalorder %s284, 1
          %s286 = scalar_select %p285, %s284, 1
          %s287 = scalar_lea.vmem %s5, %s286
          %s288 = ssub.s32 1, %s24
          %s289 = smul.u32 %s25, %s288
          %s290 = smul.u32 2, %s289
        $region44: #{tpu_custom_call.1} parent=35 // pred_fallthru
          _
      $region36: #{tpu_custom_call.1} parent=5 // pred_fallthru
        _
      %p291 = scmp.le.s32.totalorder 1, %s17
      %p292 = scmp.lt.s32.totalorder %s17, 3
      %p293 = pnand %p291, %p292
      %p294 = pneg %p293
      // Predicated region
      $region45: #{tpu_custom_call.1} parent=5 // pred_check
        _
      $region46: #{tpu_custom_call.1} parent=5 // pred_check_branch
        %296 = sbr.rel (%p293) target = $region48
      $region47: #{tpu_custom_call.1} parent=5 // pred_region
        %s297 = ssub.s32 %s17, 1
        // Predicated region
        $region49: #{tpu_custom_call.1} parent=47 // pred_check
          %p298 = pneg %p194
        $region50: #{tpu_custom_call.1} parent=47 // pred_check_branch
          %300 = sbr.rel (%p298) target = $region52
        $region51: #{tpu_custom_call.1} parent=47 // pred_region
          %301 = dma.done [#allocation8], 2048
        $region52: #{tpu_custom_call.1} parent=47 // pred_fallthru
          _
        %s302 = ssub.s32 1, %s26
        %s303 = smul.u32 %s27, %s302
        %s304 = smul.u32 2, %s303
        %p305 = scmp.lt.s32.totalorder %s304, 1
        %s306 = scalar_select %p305, %s304, 1
        %s307 = smul.addr %s306, 8
        %s308 = scalar_lea.vmem %s0, %s307
        %p309 = pneg %p59
        %p310 = pneg %p56
        %p311 = pneg %p80
        %p312 = pneg %p77
        %p313 = pneg %p101
        %p314 = pneg %p98
        %p315 = pneg %p122
        %p316 = pneg %p119
        %p317 = pneg %p143
        %p318 = pneg %p140
        %s319 = ssub.s32 1, %s26
        %s320 = smul.u32 %s27, %s319
        %s321 = smul.u32 2, %s320
        %p322 = scmp.lt.s32.totalorder %s321, 1
        %s323 = scalar_select %p322, %s321, 1
        %s324 = scalar_lea.vmem %s5, %s323
        %p325 = pneg %p173
        %p326 = pneg %p170
        %p327 = pneg %p194
        %p328 = pneg %p191
        %p329 = pneg %p222
        %p330 = pneg %p219
        %s331 = sand.u32 %s209, 1
        %s332 = scalar_lea.sflag [#allocation9], %s331
        %s333 = sand.u32 %s209, 1
        %s334 = smul.addr %s333, 16
        %s335 = scalar_lea.vmem [#allocation10], %s334
        %s336 = ssub.s32 1, %s26
        %s337 = smul.u32 %s27, %s336
        %s338 = smul.u32 2, %s337
        %p339 = scmp.lt.s32.totalorder %s338, 1
        %s340 = scalar_select %p339, %s338, 1
        %s341 = smul.addr %s340, 8
        %s342 = scalar_lea.vmem %s0, %s341
        %s343 = ssub.s32 1, %s26
        %s344 = smul.u32 %s27, %s343
        %s345 = smul.u32 2, %s344
        %s346 = ssub.s32 1, %s26
        %s347 = smul.u32 %s27, %s346
        %s348 = smul.u32 2, %s347
        %p349 = scmp.lt.s32.totalorder %s348, 1
        %s350 = scalar_select %p349, %s348, 1
        %s351 = scalar_lea.vmem %s5, %s350
        %s352 = ssub.s32 1, %s26
        %s353 = smul.u32 %s27, %s352
        %s354 = smul.u32 2, %s353
        %s355 = smul.u32 %s27, %s26
        %s356 = smul.u32 2, %s355
        %s357 = smul.u32 %s27, 2
        %p358 = scmp.eq.s32.totalorder %s26, 0
        // Predicated region
        $region53: #{tpu_custom_call.1} parent=47 // pred_check
          %p359 = pneg %p358
        $region54: #{tpu_custom_call.1} parent=47 // pred_check_branch
          %361 = sbr.rel (%p359) target = $region56
        $region55: #{tpu_custom_call.1} parent=47 // pred_region
          %p362 = scmp.eq.s32.totalorder %s27, 0
          // Predicated region
          $region57: #{tpu_custom_call.1} parent=55 // pred_check
            %p363 = pneg %p362
          $region58: #{tpu_custom_call.1} parent=55 // pred_check_branch
            %365 = sbr.rel (%p363) target = $region60
          $region59: #{tpu_custom_call.1} parent=55 // pred_region
            %vm366 = vcmask 7168
            %367 = vst.msk [vmem:[#allocation3] sm:$0xff] %vm366, 0.0
            %368 = vst.msk [vmem:[#allocation4] sm:$0xff] %vm366, 0.0
          $region60: #{tpu_custom_call.1} parent=55 // pred_fallthru
            _
          %v369 = vld [vmem:[%s342] sm:$0xff]
          %v370 = vld [vmem:[%s342 + $0x8] sm:$0xff]
          %371 = vrot.lane.b32.xlu0 %v369, 127
          %v372 = vpop.permute.xlu0 %371
          %373 = vrot.lane.b32.xlu0 %v370, 127
          %v374 = vpop.permute.xlu0 %373
          %375 = vrot.lane.b32.xlu0 %v369, 126
          %v376 = vpop.permute.xlu0 %375
          %377 = vrot.lane.b32.xlu0 %v370, 126
          %v378 = vpop.permute.xlu0 %377
          %v379 = vld [vmem:[%s1] sm:$0xff]
          %v380 = vld [vmem:[%s2] sm:$0xff]
          %382 = vset.pattern.permute.xlu0 0
          %383 = vperm.xlu0 %382, %v380
          %v384 = vpop.permute.xlu0 %383
          %vm386 = vcmask 195584
          %v388 = vsel %vm386, %v379, 0
          %390 = vmatprep.subr.mxu0 0.0
          %391 = vmatpush1.msra.mxu0 0.0
          %392 = vmatprep.subr.mxu0 0.0
          %393 = vmatpush1.msra.mxu0 0.0
          %394 = vmatprep.subr.mxu0 0.0
          %395 = vmatpush1.msra.mxu0 0.0
          %396 = vmatprep.subr.mxu0 0.0
          %397 = vmatpush1.msra.mxu0 0.0
          %398 = vmatprep.subr.mxu0 0.0
          %399 = vmatpush1.msra.mxu0 0.0
          %400 = vmatprep.subr.mxu0 0.0
          %401 = vmatpush1.msra.mxu0 0.0
          %402 = vmatprep.subr.mxu0 0.0
          %403 = vmatpush1.msra.mxu0 0.0
          %404 = vmatprep.subr.mxu0 0.0
          %405 = vmatpush1.msra.mxu0 0.0
          %406 = vmatprep.subr.mxu0 0.0
          %407 = vmatpush1.msra.mxu0 0.0
          %408 = vmatprep.subr.mxu0 0.0
          %409 = vmatpush1.msra.mxu0 0.0
          %410 = vmatprep.subr.mxu0 0.0
          %411 = vmatpush1.msra.mxu0 0.0
          %412 = vmatprep.subr.mxu0 0.0
          %413 = vmatpush1.msra.mxu0 0.0
          %414 = vmatprep.subr.mxu0 0.0
          %415 = vmatpush1.msra.mxu0 0.0
          %416 = vmatprep.subr.mxu0 0.0
          %417 = vmatpush1.msra.mxu0 %v376
          %418 = vmatprep.subr.mxu0 0.0
          %419 = vmatpush1.msra.mxu0 %v372
          %420 = vmatprep.subr.mxu0 0.0
          %421 = vmatpush1.msra.mxu0 %v369
          %422 = vmatprep.subr.mxu0 0.0
          %423 = vmatpush2.msra.mxu0 0.0
          %424 = vmatprep.subr.mxu0 0.0
          %425 = vmatpush2.msra.mxu0 0.0
          %426 = vmatprep.subr.mxu0 0.0
          %427 = vmatpush2.msra.mxu0 0.0
          %428 = vmatprep.subr.mxu0 0.0
          %429 = vmatpush2.msra.mxu0 0.0
          %430 = vmatprep.subr.mxu0 0.0
          %431 = vmatpush2.msra.mxu0 0.0
          %432 = vmatprep.subr.mxu0 0.0
          %433 = vmatpush2.msra.mxu0 0.0
          %434 = vmatprep.subr.mxu0 0.0
          %435 = vmatpush2.msra.mxu0 0.0
          %436 = vmatprep.subr.mxu0 0.0
          %437 = vmatpush2.msra.mxu0 0.0
          %438 = vmatprep.subr.mxu0 0.0
          %439 = vmatpush2.msra.mxu0 0.0
          %440 = vmatprep.subr.mxu0 0.0
          %441 = vmatpush2.msra.mxu0 0.0
          %442 = vmatprep.subr.mxu0 0.0
          %443 = vmatpush2.msra.mxu0 0.0
          %444 = vmatprep.subr.mxu0 0.0
          %445 = vmatpush2.msra.mxu0 0.0
          %446 = vmatprep.subr.mxu0 0.0
          %447 = vmatpush2.msra.mxu0 0.0
          %448 = vmatprep.subr.mxu0 0.0
          %449 = vmatpush2.msra.mxu0 0.0
          %450 = vmatprep.subr.mxu0 0.0
          %451 = vmatpush2.msra.mxu0 0.0
          %452 = vmatprep.subr.mxu0 0.0
          %453 = vmatpush2.msra.mxu0 0.0
          %454 = vmatprep.mubr.f32.mxu0 0.0
          %455 = vmatmul.mubr.f32.gmra.mxu0 %v388
          %v456 = vpop.f32.mrf.mxu0
          %v457 = vadd.f32 %v384, %v456
          %v458 = vpop.f32.mrf.mxu0
          %459 = vdwg.mxu0
          %s460 = smul.u32 %s357, 8
          %s461 = scalar_lea.vmem [#allocation2], %s460
          %462 = vst [vmem:[%s461] sm:$0xff] %v457
          %v463 = vld [vmem:[%s351] sm:$0x1]
          %v465 = vlaneseq
          %v466 = vshrl.u32 %v465, 7
          %v467 = vsub.s32 0, %v466
          %v468 = vrot.slane %v463, %v467
          %v470 = vmul.f32 %v457, %v468
          %v471 = vld [vmem:[#allocation3] sm:$0xff]
          %472 = vadd.xlane.f32.xlu0 %v470
          %v473 = vpop.xlane.xlu0 %472
          %v474 = vadd.f32 %v471, %v473
          %vm475 = vcmask 7168
          %476 = vst.msk [vmem:[#allocation3] sm:$0xff] %vm475, %v474
          %v477 = vld [vmem:[#allocation4] sm:$0xff]
          %v478 = vmul.f32 %v470, %v470
          %479 = vadd.xlane.f32.xlu0 %v478
          %v480 = vpop.xlane.xlu0 %479
          %v481 = vadd.f32 %v477, %v480
          %482 = vst.msk [vmem:[#allocation4] sm:$0xff] %vm475, %v481
          %v483 = vld [vmem:[%s2] sm:$0xff]
          %485 = vset.pattern.permute.xlu0 0
          %486 = vperm.xlu0 %485, %v483
          %v487 = vpop.permute.xlu0 %486
          %489 = vmatprep.subr.mxu0 0.0
          %490 = vmatpush1.msra.mxu0 0.0
          %491 = vmatprep.subr.mxu0 0.0
          %492 = vmatpush1.msra.mxu0 0.0
          %493 = vmatprep.subr.mxu0 0.0
          %494 = vmatpush1.msra.mxu0 0.0
          %495 = vmatprep.subr.mxu0 0.0
          %496 = vmatpush1.msra.mxu0 0.0
          %497 = vmatprep.subr.mxu0 0.0
          %498 = vmatpush1.msra.mxu0 0.0
          %499 = vmatprep.subr.mxu0 0.0
          %500 = vmatpush1.msra.mxu0 0.0
          %501 = vmatprep.subr.mxu0 0.0
          %502 = vmatpush1.msra.mxu0 0.0
          %503 = vmatprep.subr.mxu0 0.0
          %504 = vmatpush1.msra.mxu0 0.0
          %505 = vmatprep.subr.mxu0 0.0
          %506 = vmatpush1.msra.mxu0 0.0
          %507 = vmatprep.subr.mxu0 0.0
          %508 = vmatpush1.msra.mxu0 0.0
          %509 = vmatprep.subr.mxu0 0.0
          %510 = vmatpush1.msra.mxu0 0.0
          %511 = vmatprep.subr.mxu0 0.0
          %512 = vmatpush1.msra.mxu0 0.0
          %513 = vmatprep.subr.mxu0 0.0
          %514 = vmatpush1.msra.mxu0 0.0
          %515 = vmatprep.subr.mxu0 0.0
          %516 = vmatpush1.msra.mxu0 %v378
          %517 = vmatprep.subr.mxu0 0.0
          %518 = vmatpush1.msra.mxu0 %v374
          %519 = vmatprep.subr.mxu0 0.0
          %520 = vmatpush1.msra.mxu0 %v370
          %521 = vmatprep.subr.mxu0 0.0
          %522 = vmatpush2.msra.mxu0 0.0
          %523 = vmatprep.subr.mxu0 0.0
          %524 = vmatpush2.msra.mxu0 0.0
          %525 = vmatprep.subr.mxu0 0.0
          %526 = vmatpush2.msra.mxu0 0.0
          %527 = vmatprep.subr.mxu0 0.0
          %528 = vmatpush2.msra.mxu0 0.0
          %529 = vmatprep.subr.mxu0 0.0
          %530 = vmatpush2.msra.mxu0 0.0
          %531 = vmatprep.subr.mxu0 0.0
          %532 = vmatpush2.msra.mxu0 0.0
          %533 = vmatprep.subr.mxu0 0.0
          %534 = vmatpush2.msra.mxu0 0.0
          %535 = vmatprep.subr.mxu0 0.0
          %536 = vmatpush2.msra.mxu0 0.0
          %537 = vmatprep.subr.mxu0 0.0
          %538 = vmatpush2.msra.mxu0 0.0
          %539 = vmatprep.subr.mxu0 0.0
          %540 = vmatpush2.msra.mxu0 0.0
          %541 = vmatprep.subr.mxu0 0.0
          %542 = vmatpush2.msra.mxu0 0.0
          %543 = vmatprep.subr.mxu0 0.0
          %544 = vmatpush2.msra.mxu0 0.0
          %545 = vmatprep.subr.mxu0 0.0
          %546 = vmatpush2.msra.mxu0 0.0
          %547 = vmatprep.subr.mxu0 0.0
          %548 = vmatpush2.msra.mxu0 0.0
          %549 = vmatprep.subr.mxu0 0.0
          %550 = vmatpush2.msra.mxu0 0.0
          %551 = vmatprep.subr.mxu0 0.0
          %552 = vmatpush2.msra.mxu0 0.0
          %553 = vmatprep.mubr.f32.mxu0 0.0
          %554 = vmatmul.mubr.f32.gmra.mxu0 %v388
          %v555 = vpop.f32.mrf.mxu0
          %v556 = vadd.f32 %v487, %v555
          %v557 = vpop.f32.mrf.mxu0
          %558 = vdwg.mxu0
          %s559 = sadd.s32 %s357, 1
          %s560 = smul.u32 %s559, 8
          %s561 = scalar_lea.vmem [#allocation2], %s560
          %562 = vst [vmem:[%s561] sm:$0xff] %v556
          %s563 = scalar_lea.vmem %s351, 1
          %v564 = vld [vmem:[%s563] sm:$0x1]
          %v566 = vlaneseq
          %v567 = vshrl.u32 %v566, 7
          %v568 = vsub.s32 0, %v567
          %v569 = vrot.slane %v564, %v568
          %v571 = vmul.f32 %v556, %v569
          %v572 = vld [vmem:[#allocation3] sm:$0xff]
          %573 = vadd.xlane.f32.xlu0 %v571
          %v574 = vpop.xlane.xlu0 %573
          %v575 = vadd.f32 %v572, %v574
          %576 = vst.msk [vmem:[#allocation3] sm:$0xff] %vm475, %v575
          %v577 = vld [vmem:[#allocation4] sm:$0xff]
          %v578 = vmul.f32 %v571, %v571
          %579 = vadd.xlane.f32.xlu0 %v578
          %v580 = vpop.xlane.xlu0 %579
          %v581 = vadd.f32 %v577, %v580
          %582 = vst.msk [vmem:[#allocation4] sm:$0xff] %vm475, %v581
        $region56: #{tpu_custom_call.1} parent=47 // pred_fallthru
          _
        %p583 = scmp.eq.s32.totalorder %s26, 1
        // Predicated region
        $region61: #{tpu_custom_call.1} parent=47 // pred_check
          %p584 = pneg %p583
        $region62: #{tpu_custom_call.1} parent=47 // pred_check_branch
          %586 = sbr.rel (%p584) target = $region64
        $region63: #{tpu_custom_call.1} parent=47 // pred_region
          %p587 = scmp.eq.s32.totalorder %s27, 0
          // Predicated region
          $region65: #{tpu_custom_call.1} parent=63 // pred_check
            %p588 = pneg %p587
          $region66: #{tpu_custom_call.1} parent=63 // pred_check_branch
            %590 = sbr.rel (%p588) target = $region68
          $region67: #{tpu_custom_call.1} parent=63 // pred_region
            %v591 = vld [vmem:[#allocation3] sm:$0xff]
            %v592 = vmul.f32 %v591, 0.035714287
            %v593 = vld [vmem:[#allocation4] sm:$0xff]
            %v594 = vmul.f32 %v593, 0.035714287
            %v595 = vmul.f32 %v592, %v592
            %v596 = vsub.f32 %v594, %v595
            %v597 = vmax.f32 %v596, 0.0
            %v598 = vld [vmem:[%s3] sm:$0xff]
            %v599 = vadd.f32 %v597, 1e-05
            %v600 = vrsqrt.pop %v599
            %v601 = vmul.f32 %v598, %v600
            %vm602 = vcmask 7168
            %603 = vst.msk [vmem:[#allocation5] sm:$0xff] %vm602, %v601
            %v604 = vld [vmem:[%s4] sm:$0xff]
            %v605 = vld [vmem:[#allocation5] sm:$0xff]
            %v606 = vmul.f32 %v592, %v605
            %v607 = vsub.f32 %v604, %v606
            %608 = vst.msk [vmem:[#allocation6] sm:$0xff] %vm602, %v607
          $region68: #{tpu_custom_call.1} parent=63 // pred_fallthru
            _
          %s609 = smul.u32 %s357, 8
          %s610 = scalar_lea.vmem [#allocation2], %s609
          %v611 = vld [vmem:[%s610] sm:$0xff]
          %v612 = vld [vmem:[%s610 + $0x8] sm:$0xff]
          %v613 = vld [vmem:[#allocation5] sm:$0xff]
          %615 = vset.pattern.permute.xlu0 0
          %616 = vperm.xlu0 %615, %v613
          %v617 = vpop.permute.xlu0 %616
          %v619 = vmul.f32 %v611, %v617
          %v620 = vmul.f32 %v612, %v617
          %v621 = vld [vmem:[#allocation6] sm:$0xff]
          %623 = vset.pattern.permute.xlu0 0
          %624 = vperm.xlu0 %623, %v621
          %v625 = vpop.permute.xlu0 %624
          %v627 = vadd.f32 %v619, %v625
          %v628 = vadd.f32 %v620, %v625
          %v629 = vmax.f32 %v627, 0.0
          %v630 = vmax.f32 %v628, 0.0
          %v631 = vld [vmem:[#allocation7] sm:$0xff]
          %v632 = vld [vmem:[#allocation7 + $0x8] sm:$0xff]
          %v633 = vld [vmem:[#allocation7 + $0x10] sm:$0xff]
          %v634 = vld [vmem:[#allocation7 + $0x18] sm:$0xff]
          %v635 = vld [vmem:[#allocation7 + $0x20] sm:$0xff]
          %v636 = vld [vmem:[#allocation7 + $0x28] sm:$0xff]
          %v637 = vld [vmem:[#allocation7 + $0x30] sm:$0xff]
          %v638 = vld [vmem:[#allocation7 + $0x38] sm:$0xff]
          %v639 = vld [vmem:[#allocation7 + $0x40] sm:$0xff]
          %v640 = vld [vmem:[#allocation7 + $0x48] sm:$0xff]
          %v641 = vld [vmem:[#allocation7 + $0x50] sm:$0xff]
          %v642 = vld [vmem:[#allocation7 + $0x58] sm:$0xff]
          %v643 = vld [vmem:[#allocation7 + $0x60] sm:$0xff]
          %v644 = vld [vmem:[#allocation7 + $0x68] sm:$0xff]
          %v645 = vld [vmem:[#allocation7 + $0x70] sm:$0xff]
          %v646 = vld [vmem:[#allocation7 + $0x78] sm:$0xff]
          %647 = vmatprep.subr.mxu0 0.0
          %648 = vmatpush1.msra.mxu0 %v646
          %649 = vmatprep.subr.mxu0 0.0
          %650 = vmatpush1.msra.mxu0 %v645
          %651 = vmatprep.subr.mxu0 0.0
          %652 = vmatpush1.msra.mxu0 %v644
          %653 = vmatprep.subr.mxu0 0.0
          %654 = vmatpush1.msra.mxu0 %v643
          %655 = vmatprep.subr.mxu0 0.0
          %656 = vmatpush1.msra.mxu0 %v642
          %657 = vmatprep.subr.mxu0 0.0
          %658 = vmatpush1.msra.mxu0 %v641
          %659 = vmatprep.subr.mxu0 0.0
          %660 = vmatpush1.msra.mxu0 %v640
          %661 = vmatprep.subr.mxu0 0.0
          %662 = vmatpush1.msra.mxu0 %v639
          %663 = vmatprep.subr.mxu0 0.0
          %664 = vmatpush1.msra.mxu0 %v638
          %665 = vmatprep.subr.mxu0 0.0
          %666 = vmatpush1.msra.mxu0 %v637
          %667 = vmatprep.subr.mxu0 0.0
          %668 = vmatpush1.msra.mxu0 %v636
          %669 = vmatprep.subr.mxu0 0.0
          %670 = vmatpush1.msra.mxu0 %v635
          %671 = vmatprep.subr.mxu0 0.0
          %672 = vmatpush1.msra.mxu0 %v634
          %673 = vmatprep.subr.mxu0 0.0
          %674 = vmatpush1.msra.mxu0 %v633
          %675 = vmatprep.subr.mxu0 0.0
          %676 = vmatpush1.msra.mxu0 %v632
          %677 = vmatprep.subr.mxu0 0.0
          %678 = vmatpush1.msra.mxu0 %v631
          %679 = vmatprep.subr.mxu0 0.0
          %680 = vmatpush2.msra.mxu0 0.0
          %681 = vmatprep.subr.mxu0 0.0
          %682 = vmatpush2.msra.mxu0 0.0
          %683 = vmatprep.subr.mxu0 0.0
          %684 = vmatpush2.msra.mxu0 0.0
          %685 = vmatprep.subr.mxu0 0.0
          %686 = vmatpush2.msra.mxu0 0.0
          %687 = vmatprep.subr.mxu0 0.0
          %688 = vmatpush2.msra.mxu0 0.0
          %689 = vmatprep.subr.mxu0 0.0
          %690 = vmatpush2.msra.mxu0 0.0
          %691 = vmatprep.subr.mxu0 0.0
          %692 = vmatpush2.msra.mxu0 0.0
          %693 = vmatprep.subr.mxu0 0.0
          %694 = vmatpush2.msra.mxu0 0.0
          %695 = vmatprep.subr.mxu0 0.0
          %696 = vmatpush2.msra.mxu0 0.0
          %697 = vmatprep.subr.mxu0 0.0
          %698 = vmatpush2.msra.mxu0 0.0
          %699 = vmatprep.subr.mxu0 0.0
          %700 = vmatpush2.msra.mxu0 0.0
          %701 = vmatprep.subr.mxu0 0.0
          %702 = vmatpush2.msra.mxu0 0.0
          %703 = vmatprep.subr.mxu0 0.0
          %704 = vmatpush2.msra.mxu0 0.0
          %705 = vmatprep.subr.mxu0 0.0
          %706 = vmatpush2.msra.mxu0 0.0
          %707 = vmatprep.subr.mxu0 0.0
          %708 = vmatpush2.msra.mxu0 0.0
          %709 = vmatprep.subr.mxu0 0.0
          %710 = vmatpush2.msra.mxu0 0.0
          %711 = vmatprep.mubr.f32.mxu0 0.0
          %712 = vmatmul.mubr.f32.gmra.mxu0 %v629
          %v713 = vpop.f32.mrf.mxu0
          %v714 = vadd.f32 0.0, %v713
          %v715 = vpop.f32.mrf.mxu0
          %716 = vmatprep.mubr.f32.mxu0 0.0
          %717 = vmatmul.mubr.f32.gmra.mxu0 %v630
          %v718 = vpop.f32.mrf.mxu0
          %v719 = vadd.f32 0.0, %v718
          %v720 = vpop.f32.mrf.mxu0
          %721 = vdwg.mxu0
          %722 = vst [vmem:[%s335] sm:$0xff] %v714
          %723 = vst [vmem:[%s335 + $0x8] sm:$0xff] %v719
        $region64: #{tpu_custom_call.1} parent=47 // pred_fallthru
          _
        %s724 = sand.u32 %s209, 1
        %s725 = scalar_lea.sflag [#allocation9], %s724
        %s726 = sand.u32 %s209, 1
        %s727 = smul.addr %s726, 16
        %s728 = scalar_lea.vmem [#allocation10], %s727
        // Predicated region
        $region69: #{tpu_custom_call.1} parent=47 // pred_check
          %p729 = pneg %p219
        $region70: #{tpu_custom_call.1} parent=47 // pred_check_branch
          %731 = sbr.rel (%p729) target = $region72
        $region71: #{tpu_custom_call.1} parent=47 // pred_region
          %s732 = smul.u32 %s27, %s26
          %s733 = smul.u32 2, %s732
          %s735 = ssub.s32 256, 256
          %736 = vsyncadd %s725, %s735
          %s737 = smul.addr %s733, 128
          %s738 = scalar_lea.hbm %s7, %s737
          %s739 = sshll.u32 %s728, 4
          %s740 = int_to_ptr.vmem [resolvable:$true] %s739
          %745 = dma.vmem_to_hbm [thread:$0]  %s740, 256, %s738, %s725, 128, 128, 8
        $region72: #{tpu_custom_call.1} parent=47 // pred_fallthru
          _
      $region48: #{tpu_custom_call.1} parent=5 // pred_fallthru
        _
      %p746 = scmp.le.s32.totalorder 2, %s17
      // Predicated region
      $region73: #{tpu_custom_call.1} parent=5 // pred_check
        %p747 = pneg %p746
      $region74: #{tpu_custom_call.1} parent=5 // pred_check_branch
        %749 = sbr.rel (%p747) target = $region76
      $region75: #{tpu_custom_call.1} parent=5 // pred_region
        %s750 = ssub.s32 %s17, 2
        // Predicated region
        $region77: #{tpu_custom_call.1} parent=75 // pred_check
          %p751 = pneg %p225
        $region78: #{tpu_custom_call.1} parent=75 // pred_check_branch
          %753 = sbr.rel (%p751) target = $region80
        $region79: #{tpu_custom_call.1} parent=75 // pred_region
          %s754 = sand.u32 %s210, 1
          %s755 = scalar_lea.sflag [#allocation9], %s754
          %s756 = sand.u32 %s210, 1
          %s757 = smul.addr %s756, 16
          %s758 = scalar_lea.vmem [#allocation10], %s757
          %759 = dma.done %s755, 256
        $region80: #{tpu_custom_call.1} parent=75 // pred_fallthru
          _
      $region76: #{tpu_custom_call.1} parent=5 // pred_fallthru
        _
    $region6: #{tpu_custom_call.1} parent=1 // loop_footer
      %s21 = sadd.s32 1, %s17
    $region7: #{tpu_custom_call.1} parent=1 // loop_footer_branch
      %16 = sbr.rel target = $region3
    $region8: #{tpu_custom_call.1} parent=1 // loop_exit
      _
    %760 = vsyncpa [#allocation8], 1
    %s761 = scalar_lea.sflag [#allocation8], 1
    %762 = vsyncpa %s761, 1
    %763 = vsyncpa [#allocation9], 1
    %s764 = scalar_lea.sflag [#allocation9], 1
    %765 = vsyncpa %s764, 1

</llo_original>
